<compile_context>
chip_gen: v5e
topology: v5e:2x2
jax: 0.10.0
libtpu: 0.0.40
codegen_flags: <defaults>
</compile_context>

<pallas_src>
import jax
import jax.numpy as jnp
from jax.experimental import pallas as pl
from jax.experimental.pallas import tpu as pltpu

_LANE = 128


def _at_loss_kernel(xs_ref, xt_ref, out_ref):
    """One grid step: a (1, C, thw) tile of student & teacher -> (2, 128) partials."""
    s = xs_ref[0].astype(jnp.float32)  # (C, thw)
    t = xt_ref[0].astype(jnp.float32)  # (C, thw)
    c = s.shape[0]
    # TODO(synk): for C < 8 (f32) half of every vreg is sublane padding; packing 8//C
    # batch elements per block (segmented channel reductions) would recover VPU/EUP
    # throughput where the kernel is compute-bound (v7x).
    # TODO(synk): for very large C, chunk the channel axis with lax.fori_loop so live
    # VMEM stays bounded by a chunk instead of the full (C, thw) slab.

    d = s - t                                                        # (C, thw), reused twice

    # ---- loss_AT partial: sum over lanes of (mean_C(s) - mean_C(t))^2 ----
    mean_d = jnp.sum(d, axis=0, keepdims=True) * (1.0 / c)           # (1, thw)
    sse_val = jnp.sum(mean_d * mean_d)

    # ---- loss_PD partial: sum over lanes of KL(softmax_C(t) || softmax_C(s)) ----
    #   KL_lane = log(s_sum / t_sum) + cross / t_sum
    #   cross   = sum_C t_exp * (t_shift - s_shift)
    #           = -sum_C(t_exp * d) - (max_t - max_s) * t_sum        (never materializes it)
    max_s = jnp.max(s, axis=0, keepdims=True)                        # (1, thw)
    max_t = jnp.max(t, axis=0, keepdims=True)                        # (1, thw)
    t_exp = jnp.exp(t - max_t)                                        # (C, thw)
    s_sum = jnp.sum(jnp.exp(s - max_s), axis=0, keepdims=True)        # (1, thw)
    t_sum = jnp.sum(t_exp, axis=0, keepdims=True)                     # (1, thw)
    cross = -jnp.sum(t_exp * d, axis=0, keepdims=True) - (max_t - max_s) * t_sum
    inv_t_sum = 1.0 / t_sum                                           # exact (keeps 1e-5 tol)
    kl_lane = jnp.log(s_sum * inv_t_sum) + cross * inv_t_sum          # (1, thw)
    kl_val = jnp.sum(kl_lane)

    # Single packed per-block partial: row 0 = SSE, row 1 = KL (lane-broadcast; the
    # wrapper reads lane 0).  Distinct block per grid point -> fully parallel grid.
    row = jax.lax.broadcasted_iota(jnp.int32, out_ref.shape, len(out_ref.shape) - 2)
    out_ref[...] = jnp.where(row == 0, sse_val, kl_val).astype(jnp.float32)


def _vmem_capacity_bytes():
    try:
        cap = getattr(pltpu.get_tpu_info(), "vmem_capacity_bytes", None)
        if cap:
            return int(cap)
    except Exception:
        pass
    return 64 * 1024 * 1024  # conservative fallback: v7x per-TensorCore VMEM


def _round_up(a, b):
    return ((a + b - 1) // b) * b


def at_loss(x_student, x_teacher, gt=None, step=None):
    """Pallas implementation of ATLoss.forward (gt / step unused, as in PyTorch)."""
    N, C, H, W = x_student.shape
    HW = H * W
    xs = x_student.reshape(N, C, HW)
    xt = x_teacher.reshape(N, C, HW)
    in_itemsize = xs.dtype.itemsize

    # --- VMEM budget: count the f32 intermediates, key off the chip's VMEM ---
    phys_vmem = _vmem_capacity_bytes()
    vmem_limit = int(phys_vmem * 0.625)          # ~40 MiB on 64-MiB parts, ~80 MiB on 128-MiB
    # Per-lane working set of one block:
    #   2 inputs x 2 pipeline buffers x C x in_itemsize      (auto-pipelined input copies)
    # + ~6 full (C, thw) f32 intermediates (casts of s/t, d, t_exp, exp(s-max), product)
    work_per_lane = 4 * C * in_itemsize + 6 * C * 4
    # Ensure at least one 128-lane block fits even for large C (until C-chunking lands).
    vmem_limit = max(vmem_limit, min(work_per_lane * _LANE + (8 << 20), int(phys_vmem * 0.9)))
    headroom = 4 << 20
    max_thw = max(_LANE, ((vmem_limit - headroom) // work_per_lane) // _LANE * _LANE)

    # --- spatial tiling: lane-dense, pad UP to n_hw * thw (padded lanes add exactly 0) ---
    n_hw = -(-HW // max_thw)                       # number of spatial tiles
    thw = _round_up(-(-HW // n_hw), _LANE)         # balanced tile, multiple of 128, <= max_thw
    HWp = n_hw * thw
    pad = HWp - HW
    if pad:
        xs = jnp.pad(xs, ((0, 0), (0, 0), (0, pad)))
        xt = jnp.pad(xt, ((0, 0), (0, 0), (0, pad)))

    # --- grid: fully parallel; larger extent first so both TCs get work on v7x ---
    if n_hw >= N:
        grid = (n_hw, N)
        in_idx = lambda j, i: (i, 0, j)
        out_idx = lambda j, i: (i, j, 0, 0)
    else:
        grid = (N, n_hw)
        in_idx = lambda i, j: (i, 0, j)
        out_idx = lambda i, j: (i, j, 0, 0)

    # Deeper input buffering only as a fallback for tiny blocks with enough steps to hide.
    if thw <= 256 and N * n_hw >= 8:
        in_spec = pl.BlockSpec((1, C, thw), in_idx, pipeline_mode=pl.Buffered(3))
    else:
        in_spec = pl.BlockSpec((1, C, thw), in_idx)

    parts = pl.pallas_call(
        _at_loss_kernel,
        out_shape=jax.ShapeDtypeStruct((N, n_hw, 2, _LANE), jnp.float32),
        grid_spec=pltpu.PrefetchScalarGridSpec(
            num_scalar_prefetch=0,
            grid=grid,
            in_specs=[in_spec, in_spec],
            out_specs=pl.BlockSpec((1, 1, 2, _LANE), out_idx),
        ),
        compiler_params=pltpu.CompilerParams(
            dimension_semantics=("parallel", "parallel"),
            vmem_limit_bytes=int(vmem_limit),
        ),
    )(xs, xt)

    # loss_AT = SSE / (N*H*W);  loss_PD = KL_sum / (numel / C) = KL_sum / (N*H*W)
    return jnp.sum(parts[..., 0]) / jnp.float32(N * HW)


def _reference(x_student, x_teacher):
    """Pure-JAX reference mirroring the PyTorch forward."""
    loss_at = jnp.mean(
        (jnp.mean(x_student, axis=1) - jnp.mean(x_teacher, axis=1)) ** 2
    )
    log_p_s = jax.nn.log_softmax(x_student, axis=1)
    p_t = jax.nn.softmax(x_teacher, axis=1)
    kl = jnp.sum(p_t * (jnp.log(p_t) - log_p_s))
    loss_pd = kl / (x_student.size / x_student.shape[1])
    return loss_at + loss_pd


if __name__ == "__main__":
    key = jax.random.PRNGKey(0)

    # Primary check: N=2, C=4, 16x16 spatial (HW is a multiple of 128).
    k1, k2 = jax.random.split(key)
    N, C, H, W = 2, 4, 16, 16
    x_student = jax.random.normal(k1, (N, C, H, W), dtype=jnp.float32)
    x_teacher = jax.random.normal(k2, (N, C, H, W), dtype=jnp.float32)
    gt = jnp.zeros((N, 1, H, W), dtype=jnp.float32)  # unused, as in PyTorch
    step = 0                                          # unused, as in PyTorch

    loss = at_loss(x_student, x_teacher, gt, step)
    jax.block_until_ready(loss)
    ref = _reference(x_student, x_teacher)
    assert jnp.allclose(loss, ref, rtol=1e-5, atol=1e-5), (loss, ref)

    # Secondary check: non-128-multiple spatial size exercises the lane padding.
    k3, k4 = jax.random.split(k2)
    xs2 = jax.random.normal(k3, (2, 4, 7, 7), dtype=jnp.float32)
    xt2 = jax.random.normal(k4, (2, 4, 7, 7), dtype=jnp.float32)
    loss2 = at_loss(xs2, xt2)
    jax.block_until_ready(loss2)
    ref2 = _reference(xs2, xt2)
    assert jnp.allclose(loss2, ref2, rtol=1e-5, atol=1e-5), (loss2, ref2)

    print("KERNEL_OK")
</pallas_src>

<mosaic_0001>
module attributes {stable_mosaic.version = 11 : i64} {
  func.func @_at_loss_kernel(%arg0: i32, %arg1: i32, %arg2: memref<1x4x256xf32, #tpu.memory_space<vmem>>, %arg3: memref<1x4x256xf32, #tpu.memory_space<vmem>>, %arg4: memref<1x1x2x128xf32, #tpu.memory_space<vmem>>) attributes {dimension_semantics = [#tpu.dimension_semantics<parallel>, #tpu.dimension_semantics<parallel>], iteration_bounds = array<i64: 2, 1>, scalar_prefetch = 0 : i64, scratch_operands = 0 : i64, tpu.core_type = #tpu.core_type<tc>, window_params = [{transform_indices = @transform_0, window_bounds = array<i64: 1, 4, 256>}, {transform_indices = @transform_1, window_bounds = array<i64: 1, 4, 256>}, {transform_indices = @transform_2, window_bounds = array<i64: 1, 1, 2, 128>}]} {
    %c0 = arith.constant 0 : index
    %c0_0 = arith.constant 0 : index
    %c0_1 = arith.constant 0 : index
    %0 = vector.load %arg2[%c0, %c0_0, %c0_1] : memref<1x4x256xf32, #tpu.memory_space<vmem>>, vector<1x4x256xf32>
    %1 = vector.shape_cast %0 : vector<1x4x256xf32> to vector<4x256xf32>
    %c0_2 = arith.constant 0 : index
    %c0_3 = arith.constant 0 : index
    %c0_4 = arith.constant 0 : index
    %2 = vector.load %arg3[%c0_2, %c0_3, %c0_4] : memref<1x4x256xf32, #tpu.memory_space<vmem>>, vector<1x4x256xf32>
    %3 = vector.shape_cast %2 : vector<1x4x256xf32> to vector<4x256xf32>
    %4 = arith.subf %1, %3 : vector<4x256xf32>
    %cst = arith.constant dense<0.000000e+00> : vector<256xf32>
    %5 = vector.multi_reduction <add>, %4, %cst [0] : vector<4x256xf32> to vector<256xf32>
    %6 = vector.shape_cast %5 : vector<256xf32> to vector<1x256xf32>
    %cst_5 = arith.constant 2.500000e-01 : f32
    %7 = vector.broadcast %cst_5 : f32 to vector<1x256xf32>
    %8 = arith.mulf %6, %7 : vector<1x256xf32>
    %9 = arith.mulf %8, %8 : vector<1x256xf32>
    %10 = vector.shape_cast %9 : vector<1x256xf32> to vector<1x1x256xf32>
    %cst_6 = arith.constant dense<0.000000e+00> : vector<1xf32>
    %11 = vector.multi_reduction <add>, %10, %cst_6 [1, 2] : vector<1x1x256xf32> to vector<1xf32>
    %12 = vector.shape_cast %11 : vector<1xf32> to vector<1x1x1xf32>
    %13 = vector.extract %12[0, 0, 0] : f32 from vector<1x1x1xf32>
    %cst_7 = arith.constant dense<0xFF800000> : vector<256xf32>
    %14 = vector.multi_reduction <maximumf>, %1, %cst_7 [0] : vector<4x256xf32> to vector<256xf32>
    %15 = vector.shape_cast %14 : vector<256xf32> to vector<1x256xf32>
    %cst_8 = arith.constant dense<0xFF800000> : vector<256xf32>
    %16 = vector.multi_reduction <maximumf>, %3, %cst_8 [0] : vector<4x256xf32> to vector<256xf32>
    %17 = vector.shape_cast %16 : vector<256xf32> to vector<1x256xf32>
    %18 = vector.broadcast %17 : vector<1x256xf32> to vector<4x256xf32>
    %19 = arith.subf %3, %18 : vector<4x256xf32>
    %20 = math.exp %19 : vector<4x256xf32>
    %21 = vector.broadcast %15 : vector<1x256xf32> to vector<4x256xf32>
    %22 = arith.subf %1, %21 : vector<4x256xf32>
    %23 = math.exp %22 : vector<4x256xf32>
    %cst_9 = arith.constant dense<0.000000e+00> : vector<256xf32>
    %24 = vector.multi_reduction <add>, %23, %cst_9 [0] : vector<4x256xf32> to vector<256xf32>
    %25 = vector.shape_cast %24 : vector<256xf32> to vector<1x256xf32>
    %cst_10 = arith.constant dense<0.000000e+00> : vector<256xf32>
    %26 = vector.multi_reduction <add>, %20, %cst_10 [0] : vector<4x256xf32> to vector<256xf32>
    %27 = vector.shape_cast %26 : vector<256xf32> to vector<1x256xf32>
    %28 = arith.mulf %20, %4 : vector<4x256xf32>
    %cst_11 = arith.constant dense<0.000000e+00> : vector<256xf32>
    %29 = vector.multi_reduction <add>, %28, %cst_11 [0] : vector<4x256xf32> to vector<256xf32>
    %30 = vector.shape_cast %29 : vector<256xf32> to vector<1x256xf32>
    %cst_12 = arith.constant 0.000000e+00 : f32
    %31 = vector.broadcast %cst_12 : f32 to vector<1x256xf32>
    %32 = arith.subf %31, %30 : vector<1x256xf32>
    %33 = arith.subf %17, %15 : vector<1x256xf32>
    %34 = arith.mulf %33, %27 : vector<1x256xf32>
    %35 = arith.subf %32, %34 : vector<1x256xf32>
    %cst_13 = arith.constant 1.000000e+00 : f32
    %36 = vector.broadcast %cst_13 : f32 to vector<1x256xf32>
    %37 = arith.divf %36, %27 : vector<1x256xf32>
    %38 = arith.mulf %25, %37 : vector<1x256xf32>
    %39 = math.log %38 : vector<1x256xf32>
    %40 = arith.mulf %35, %37 : vector<1x256xf32>
    %41 = arith.addf %39, %40 : vector<1x256xf32>
    %42 = vector.shape_cast %41 : vector<1x256xf32> to vector<1x1x256xf32>
    %cst_14 = arith.constant dense<0.000000e+00> : vector<1xf32>
    %43 = vector.multi_reduction <add>, %42, %cst_14 [1, 2] : vector<1x1x256xf32> to vector<1xf32>
    %44 = vector.shape_cast %43 : vector<1xf32> to vector<1x1x1xf32>
    %45 = vector.extract %44[0, 0, 0] : f32 from vector<1x1x1xf32>
    %46 = tpu.iota {dimensions = array<i32: 2>} : vector<1x1x2x128xi32>
    %c0_i32 = arith.constant 0 : i32
    %47 = vector.broadcast %c0_i32 : i32 to vector<1x1x2x128xi32>
    %48 = arith.cmpi eq, %46, %47 : vector<1x1x2x128xi32>
    %49 = vector.broadcast %13 : f32 to vector<1x1x2x128xf32>
    %50 = vector.broadcast %45 : f32 to vector<1x1x2x128xf32>
    %51 = arith.select %48, %49, %50 : vector<1x1x2x128xi1>, vector<1x1x2x128xf32>
    %c0_15 = arith.constant 0 : index
    %c0_16 = arith.constant 0 : index
    %c0_17 = arith.constant 0 : index
    %c0_18 = arith.constant 0 : index
    %52 = vector.load %arg4[%c0_15, %c0_16, %c0_17, %c0_18] : memref<1x1x2x128xf32, #tpu.memory_space<vmem>>, vector<1x1x2x128xf32>
    tpu.vector_store %arg4[%c0_15, %c0_16, %c0_17, %c0_18], %51 {strides = array<i32>} : memref<1x1x2x128xf32, #tpu.memory_space<vmem>>, vector<1x1x2x128xf32>,
    return
  }
  func.func @transform_0(%arg0: i32, %arg1: i32) -> (i32, i32, i32) {
    %c0_i32 = arith.constant 0 : i32
    %c0_i32_0 = arith.constant 0 : i32
    return %arg0, %c0_i32, %arg1 : i32, i32, i32
  }
  func.func @transform_1(%arg0: i32, %arg1: i32) -> (i32, i32, i32) {
    %c0_i32 = arith.constant 0 : i32
    %c0_i32_0 = arith.constant 0 : i32
    return %arg0, %c0_i32, %arg1 : i32, i32, i32
  }
  func.func @transform_2(%arg0: i32, %arg1: i32) -> (i32, i32, i32, i32) {
    %c0_i32 = arith.constant 0 : i32
    %c0_i32_0 = arith.constant 0 : i32
    %c0_i32_1 = arith.constant 0 : i32
    return %arg0, %arg1, %c0_i32, %c0_i32_0 : i32, i32, i32, i32
  }
}

</mosaic_0001>

<llo_original>
// kernel: tpu_custom_call.1
$region0: #{tpu_custom_call.1}
  #allocation0 [shape = 'u32[]', space=smem, size = 0x4, offset = 0x4, fixed_abs, tag = 'smem constant byte address 0x4 - core index']
  #allocation1 [shape = 'u32[72,128]{1,0:T(1,128)}', space=vmem, size = 0x9000, scoped, tag = 'internal scratch']
  %s0 = inlined_call_operand.hbm [shape: f32[2,4,256], index: 0, kind: input, shape index: {}]
  %s1 = inlined_call_operand.hbm [shape: f32[2,4,256], index: 1, kind: input, shape index: {}]
  %s2 = inlined_call_operand.hbm [shape: f32[2,1,2,128], index: 2, kind: output, shape index: {}]
  %s3 = sld [smem:[#allocation0]]
  $region49: #{tpu_custom_call.1} parent=0
    _
  %s5 = ssub.s32 1, %s3
  %s6 = scalar_select 0, %s5, %s3
  $region1: #{tpu_custom_call.1} parent=0
    #allocation2 [shape = 'u8[8192]{0}', space=vmem, size = 0x2000, scoped, tag = 'input window, operand 0']
    #allocation3 [shape = 's32[2]{0}', space=sflag, size = 0x8, scoped, tag = 'scoped memory for tpu_custom_call.1']
    #allocation4 [shape = 's32[2]{0}', space=sflag, size = 0x8, scoped, tag = 'scoped memory for tpu_custom_call.1']
    #allocation5 [shape = 'u8[8192]{0}', space=vmem, size = 0x2000, scoped, tag = 'input window, operand 1']
    #allocation6 [shape = 's32[2]{0}', space=sflag, size = 0x8, scoped, tag = 'scoped memory for tpu_custom_call.1']
    #allocation7 [shape = 'u8[2048]{0}', space=vmem, size = 0x800, scoped, tag = 'output window, operand 0']
    %7 = vsyncpa [#allocation3], 0
    %s8 = scalar_lea.sflag [#allocation3], 1
    %9 = vsyncpa %s8, 0
    %10 = vsyncpa [#allocation6], 0
    %s11 = scalar_lea.sflag [#allocation6], 1
    %12 = vsyncpa %s11, 0
    %13 = vsyncpa [#allocation4], 0
    %s14 = scalar_lea.sflag [#allocation4], 1
    %15 = vsyncpa %s14, 0
    loop: start=0, step=1, limit=4
    $region2: #{tpu_custom_call.1} parent=1 // loop_pre_header
      _
    $region3: #{tpu_custom_call.1} parent=1 // loop_header
      %s17 = sphi 0, %s21
      %p18 = scmp.ge.s32.totalorder %s17, 4
      %s24 = sphi 0, %s36
      %s25 = sphi 0, %s32
      %s26 = sphi 0, %s24
      %s27 = sphi 0, %s25
      %s28 = sphi 0, %s26
      %s29 = sphi 0, %s27
      %s41 = sphi 0, %s43
      %s44 = sphi 0, %s41
      %s45 = sphi 0, %s44
      %s61 = sphi 0, %s45
      %s69 = sphi 0, %s71
      %s72 = sphi 0, %s69
      %s73 = sphi 0, %s72
      %s89 = sphi 0, %s73
      %s97 = sphi 0, %s99
      %s100 = sphi 0, %s97
      %s101 = sphi 0, %s100
      %s117 = sphi 0, %s101
    $region4: #{tpu_custom_call.1} parent=1 // loop_header_branch
      %20 = sbr.rel (%p18) target = $region8
    $region5: #{tpu_custom_call.1} parent=1 // loop_body
      %s22 = ssub.s32 %s17, 1
      %s23 = ssub.s32 %s17, 2
      %s30 = sadd.s32 1, %s25
      %p31 = scmp.ge.s32.totalorder %s30, 1
      %s32 = scalar_select %p31, 0, %s30
      %s33 = sadd.s32 1, %s24
      %s34 = scalar_select %p31, %s33, %s24
      %p35 = scmp.ge.s32.totalorder %s34, 2
      %s36 = scalar_select %p35, 0, %s34
      %s37 = ssub.s32 %s24, %s36
      %s38 = ssub.s32 %s25, %s32
      %s39 = sor.u32 %s37, %s38
      %p40 = scmp.eq.s32.totalorder %s39, 0
      %s42 = sadd.s32 %s41, 1
      %s43 = scalar_select %p40, %s41, %s42
      %p46 = pneg %p40
      %p47 = scmp.eq.s32.totalorder %s17, 1
      %p48 = por %p46, %p47
      %p49 = scmp.ne.s32.totalorder %s41, %s44
      %p50 = scmp.eq.s32.totalorder %s17, 0
      %p51 = por %p49, %p50
      %p52 = scmp.ne.s32.totalorder %s41, %s44
      %p53 = scmp.eq.s32.totalorder %s22, 1
      %p54 = por %p52, %p53
      %p55 = scmp.ne.s32.totalorder %s44, %s45
      %p56 = scmp.eq.s32.totalorder %s22, 0
      %p57 = por %p55, %p56
      %p58 = scmp.ne.s32.totalorder %s44, %s45
      %p59 = scmp.eq.s32.totalorder %s23, 1
      %p60 = por %p58, %p59
      %p62 = scmp.ne.s32.totalorder %s45, %s61
      %p63 = scmp.eq.s32.totalorder %s23, 0
      %p64 = por %p62, %p63
      %s65 = ssub.s32 %s24, %s36
      %s66 = ssub.s32 %s25, %s32
      %s67 = sor.u32 %s65, %s66
      %p68 = scmp.eq.s32.totalorder %s67, 0
      %s70 = sadd.s32 %s69, 1
      %s71 = scalar_select %p68, %s69, %s70
      %p74 = pneg %p68
      %p75 = scmp.eq.s32.totalorder %s17, 1
      %p76 = por %p74, %p75
      %p77 = scmp.ne.s32.totalorder %s69, %s72
      %p78 = scmp.eq.s32.totalorder %s17, 0
      %p79 = por %p77, %p78
      %p80 = scmp.ne.s32.totalorder %s69, %s72
      %p81 = scmp.eq.s32.totalorder %s22, 1
      %p82 = por %p80, %p81
      %p83 = scmp.ne.s32.totalorder %s72, %s73
      %p84 = scmp.eq.s32.totalorder %s22, 0
      %p85 = por %p83, %p84
      %p86 = scmp.ne.s32.totalorder %s72, %s73
      %p87 = scmp.eq.s32.totalorder %s23, 1
      %p88 = por %p86, %p87
      %p90 = scmp.ne.s32.totalorder %s73, %s89
      %p91 = scmp.eq.s32.totalorder %s23, 0
      %p92 = por %p90, %p91
      %s93 = ssub.s32 %s24, %s36
      %s94 = ssub.s32 %s25, %s32
      %s95 = sor.u32 %s93, %s94
      %p96 = scmp.eq.s32.totalorder %s95, 0
      %s98 = sadd.s32 %s97, 1
      %s99 = scalar_select %p96, %s97, %s98
      %p102 = pneg %p96
      %p103 = scmp.eq.s32.totalorder %s17, 1
      %p104 = por %p102, %p103
      %p105 = scmp.ne.s32.totalorder %s97, %s100
      %p106 = scmp.eq.s32.totalorder %s17, 0
      %p107 = por %p105, %p106
      %p108 = scmp.ne.s32.totalorder %s97, %s100
      %p109 = scmp.eq.s32.totalorder %s22, 1
      %p110 = por %p108, %p109
      %p111 = scmp.ne.s32.totalorder %s100, %s101
      %p112 = scmp.eq.s32.totalorder %s22, 0
      %p113 = por %p111, %p112
      %p114 = scmp.ne.s32.totalorder %s100, %s101
      %p115 = scmp.eq.s32.totalorder %s23, 1
      %p116 = por %p114, %p115
      %p118 = scmp.ne.s32.totalorder %s101, %s117
      %p119 = scmp.eq.s32.totalorder %s23, 0
      %p120 = por %p118, %p119
      %p121 = scmp.le.s32.totalorder 1, %s17
      %p122 = scmp.lt.s32.totalorder %s17, 3
      %p123 = pnand %p121, %p122
      %p124 = pneg %p123
      // Predicated region
      $region9: #{tpu_custom_call.1} parent=5 // pred_check
        _
      $region10: #{tpu_custom_call.1} parent=5 // pred_check_branch
        %126 = sbr.rel (%p123) target = $region12
      $region11: #{tpu_custom_call.1} parent=5 // pred_region
        %s127 = ssub.s32 %s17, 1
      $region12: #{tpu_custom_call.1} parent=5 // pred_fallthru
        _
      %p128 = scmp.lt.s32.totalorder %s17, 2
      // Predicated region
      $region13: #{tpu_custom_call.1} parent=5 // pred_check
        %p129 = pneg %p128
      $region14: #{tpu_custom_call.1} parent=5 // pred_check_branch
        %131 = sbr.rel (%p129) target = $region16
      $region15: #{tpu_custom_call.1} parent=5 // pred_region
        // Predicated region
        $region17: #{tpu_custom_call.1} parent=15 // pred_check
          %p132 = pneg %p51
        $region18: #{tpu_custom_call.1} parent=15 // pred_check_branch
          %134 = sbr.rel (%p132) target = $region20
        $region19: #{tpu_custom_call.1} parent=15 // pred_region
          %s135 = sand.u32 %s41, 1
          %s136 = scalar_lea.sflag [#allocation3], %s135
          %s137 = sand.u32 %s41, 1
          %s138 = smul.addr %s137, 8
          %s139 = scalar_lea.vmem [#allocation2], %s138
          %s140 = smul.u32 2, %s25
          %142 = vsyncadd %s136, 0
          %s143 = smul.addr %s24, 2
          %s144 = sadd.s32 %s140, %s143
          %s145 = smul.addr %s144, 4
          %s146 = scalar_lea.hbm %s0, %s145
          %s148 = sshll.u32 %s146, 4
          %s149 = int_to_ptr.hbm [resolvable:$true] %s148
          %s150 = sshll.u32 %s139, 4
          %s151 = int_to_ptr.vmem [resolvable:$true] %s150
          %153 = dma.hbm_to_vmem [thread:$0]  %s149, 128, %s151, %s136
        $region20: #{tpu_custom_call.1} parent=15 // pred_fallthru
          _
        // Predicated region
        $region21: #{tpu_custom_call.1} parent=15 // pred_check
          %p154 = pneg %p79
        $region22: #{tpu_custom_call.1} parent=15 // pred_check_branch
          %156 = sbr.rel (%p154) target = $region24
        $region23: #{tpu_custom_call.1} parent=15 // pred_region
          %s157 = sand.u32 %s69, 1
          %s158 = scalar_lea.sflag [#allocation6], %s157
          %s159 = sand.u32 %s69, 1
          %s160 = smul.addr %s159, 8
          %s161 = scalar_lea.vmem [#allocation5], %s160
          %s162 = smul.u32 2, %s25
          %164 = vsyncadd %s158, 0
          %s165 = smul.addr %s24, 2
          %s166 = sadd.s32 %s162, %s165
          %s167 = smul.addr %s166, 4
          %s168 = scalar_lea.hbm %s1, %s167
          %s170 = sshll.u32 %s168, 4
          %s171 = int_to_ptr.hbm [resolvable:$true] %s170
          %s172 = sshll.u32 %s161, 4
          %s173 = int_to_ptr.vmem [resolvable:$true] %s172
          %175 = dma.hbm_to_vmem [thread:$0]  %s171, 128, %s173, %s158
        $region24: #{tpu_custom_call.1} parent=15 // pred_fallthru
          _
      $region16: #{tpu_custom_call.1} parent=5 // pred_fallthru
        _
      %p176 = scmp.le.s32.totalorder 1, %s17
      %p177 = scmp.lt.s32.totalorder %s17, 3
      %p178 = pnand %p176, %p177
      %p179 = pneg %p178
      // Predicated region
      $region25: #{tpu_custom_call.1} parent=5 // pred_check
        _
      $region26: #{tpu_custom_call.1} parent=5 // pred_check_branch
        %181 = sbr.rel (%p178) target = $region28
      $region27: #{tpu_custom_call.1} parent=5 // pred_region
        %s182 = ssub.s32 %s17, 1
        %s183 = sand.u32 %s44, 1
        %s184 = scalar_lea.sflag [#allocation3], %s183
        %s185 = sand.u32 %s44, 1
        %s186 = smul.addr %s185, 8
        %s187 = scalar_lea.vmem [#allocation2], %s186
        // Predicated region
        $region29: #{tpu_custom_call.1} parent=27 // pred_check
          %p188 = pneg %p57
        $region30: #{tpu_custom_call.1} parent=27 // pred_check_branch
          %190 = sbr.rel (%p188) target = $region32
        $region31: #{tpu_custom_call.1} parent=27 // pred_region
          %192 = dma.done %s184, 128
        $region32: #{tpu_custom_call.1} parent=27 // pred_fallthru
          _
        %s193 = sand.u32 %s72, 1
        %s194 = scalar_lea.sflag [#allocation6], %s193
        %s195 = sand.u32 %s72, 1
        %s196 = smul.addr %s195, 8
        %s197 = scalar_lea.vmem [#allocation5], %s196
        // Predicated region
        $region33: #{tpu_custom_call.1} parent=27 // pred_check
          %p198 = pneg %p85
        $region34: #{tpu_custom_call.1} parent=27 // pred_check_branch
          %200 = sbr.rel (%p198) target = $region36
        $region35: #{tpu_custom_call.1} parent=27 // pred_region
          %202 = dma.done %s194, 128
        $region36: #{tpu_custom_call.1} parent=27 // pred_fallthru
          _
        %s203 = sand.u32 %s44, 1
        %s204 = scalar_lea.sflag [#allocation3], %s203
        %s205 = sand.u32 %s44, 1
        %s206 = smul.addr %s205, 8
        %s207 = scalar_lea.vmem [#allocation2], %s206
        %p208 = pneg %p57
        %p209 = pneg %p54
        %s210 = sand.u32 %s72, 1
        %s211 = scalar_lea.sflag [#allocation6], %s210
        %s212 = sand.u32 %s72, 1
        %s213 = smul.addr %s212, 8
        %s214 = scalar_lea.vmem [#allocation5], %s213
        %p215 = pneg %p85
        %p216 = pneg %p82
        %p217 = pneg %p113
        %p218 = pneg %p110
        %s219 = sand.u32 %s100, 1
        %s220 = scalar_lea.sflag [#allocation4], %s219
        %s221 = sand.u32 %s100, 1
        %s222 = smul.addr %s221, 2
        %s223 = scalar_lea.vmem [#allocation7], %s222
        %s224 = smul.u32 2, %s27
        %s225 = smul.u32 2, %s27
        %v226 = vld [vmem:[%s187] sm:$0xff]
        %v227 = vld [vmem:[%s197] sm:$0xff]
        %v228 = vsub.f32 %v226, %v227
        %230 = vst [vmem:[#allocation1] ss:$2 sm:$0xff] %v228
        %v231 = vld.sshfl [vmem:[#allocation1] sm:$0xff pattern:$0x75316420]
        %v232 = vld.sshfl [vmem:[#allocation1 + $0x8] sm:$0xff pattern:$0x75316420]
        %vm235 = vcmask 1043456
        %v236 = vsel %vm235, %v231, 0.0
        %v237 = vrot.slane %v236, 4
        %v238 = vadd.f32 %v236, %v237
        %v239 = vrot.slane %v238, 2
        %v240 = vadd.f32 %v238, %v239
        %v241 = vrot.slane %v240, 1
        %v242 = vadd.f32 %v240, %v241
        %v243 = vsel %vm235, %v232, 0.0
        %v244 = vrot.slane %v243, 4
        %v245 = vadd.f32 %v243, %v244
        %v246 = vrot.slane %v245, 2
        %v247 = vadd.f32 %v245, %v246
        %v248 = vrot.slane %v247, 1
        %v249 = vadd.f32 %v247, %v248
        %v250 = vmul.f32 %v242, 0.25
        %v251 = vmul.f32 %v249, 0.25
        %v252 = vmul.f32 %v250, %v250
        %v253 = vmul.f32 %v251, %v251
        %vm254 = vcmask 1040384
        %v255 = vsel %vm254, %v252, 0.0
        %v256 = vsel %vm254, %v253, 0.0
        %v257 = vadd.f32 %v255, %v256
        %258 = vadd.xlane.f32.xlu0 %v257
        %v259 = vpop.xlane.xlu0 %258
        %v260 = vrot.slane %v259, 4
        %v261 = vadd.f32 %v259, %v260
        %v262 = vrot.slane %v261, 2
        %v263 = vadd.f32 %v261, %v262
        %v264 = vrot.slane %v263, 1
        %v265 = vadd.f32 %v263, %v264
        %s266 = vtos %v265
        %268 = vst [vmem:[#allocation1] ss:$2 sm:$0xff] %v226
        %v269 = vld.sshfl [vmem:[#allocation1] sm:$0xff pattern:$0x75316420]
        %v270 = vld.sshfl [vmem:[#allocation1 + $0x8] sm:$0xff pattern:$0x75316420]
        %v273 = vsel %vm235, %v269, -inf
        %v274 = vrot.slane %v273, 4
        %v275 = vmax.f32 %v273, %v274
        %v276 = vrot.slane %v275, 2
        %v277 = vmax.f32 %v275, %v276
        %v278 = vrot.slane %v277, 1
        %v279 = vmax.f32 %v277, %v278
        %v280 = vsel %vm235, %v270, -inf
        %v281 = vrot.slane %v280, 4
        %v282 = vmax.f32 %v280, %v281
        %v283 = vrot.slane %v282, 2
        %v284 = vmax.f32 %v282, %v283
        %v285 = vrot.slane %v284, 1
        %v286 = vmax.f32 %v284, %v285
        %288 = vst [vmem:[#allocation1] ss:$2 sm:$0xff] %v227
        %v289 = vld.sshfl [vmem:[#allocation1] sm:$0xff pattern:$0x75316420]
        %v290 = vld.sshfl [vmem:[#allocation1 + $0x8] sm:$0xff pattern:$0x75316420]
        %v293 = vsel %vm235, %v289, -inf
        %v294 = vrot.slane %v293, 4
        %v295 = vmax.f32 %v293, %v294
        %v296 = vrot.slane %v295, 2
        %v297 = vmax.f32 %v295, %v296
        %v298 = vrot.slane %v297, 1
        %v299 = vmax.f32 %v297, %v298
        %v300 = vsel %vm235, %v290, -inf
        %v301 = vrot.slane %v300, 4
        %v302 = vmax.f32 %v300, %v301
        %v303 = vrot.slane %v302, 2
        %v304 = vmax.f32 %v302, %v303
        %v305 = vrot.slane %v304, 1
        %v306 = vmax.f32 %v304, %v305
        %v309 = vrot.slane %v306, 4
        %v310 = vsel %vm235, %v299, %v309
        %v312 = vsub.f32 %v227, %v310
        %v313 = vmul.f32 %v312, 1.442695
        %v314 = vpow.pop %v313
        %v317 = vrot.slane %v286, 4
        %v318 = vsel %vm235, %v279, %v317
        %v320 = vsub.f32 %v226, %v318
        %v321 = vmul.f32 %v320, 1.442695
        %v322 = vpow.pop %v321
        %324 = vst [vmem:[#allocation1] ss:$2 sm:$0xff] %v322
        %v325 = vld.sshfl [vmem:[#allocation1] sm:$0xff pattern:$0x75316420]
        %v326 = vld.sshfl [vmem:[#allocation1 + $0x8] sm:$0xff pattern:$0x75316420]
        %v329 = vsel %vm235, %v325, 0.0
        %v330 = vrot.slane %v329, 4
        %v331 = vadd.f32 %v329, %v330
        %v332 = vrot.slane %v331, 2
        %v333 = vadd.f32 %v331, %v332
        %v334 = vrot.slane %v333, 1
        %v335 = vadd.f32 %v333, %v334
        %v336 = vsel %vm235, %v326, 0.0
        %v337 = vrot.slane %v336, 4
        %v338 = vadd.f32 %v336, %v337
        %v339 = vrot.slane %v338, 2
        %v340 = vadd.f32 %v338, %v339
        %v341 = vrot.slane %v340, 1
        %v342 = vadd.f32 %v340, %v341
        %344 = vst [vmem:[#allocation1] ss:$2 sm:$0xff] %v314
        %v345 = vld.sshfl [vmem:[#allocation1] sm:$0xff pattern:$0x75316420]
        %v346 = vld.sshfl [vmem:[#allocation1 + $0x8] sm:$0xff pattern:$0x75316420]
        %v349 = vsel %vm235, %v345, 0.0
        %v350 = vrot.slane %v349, 4
        %v351 = vadd.f32 %v349, %v350
        %v352 = vrot.slane %v351, 2
        %v353 = vadd.f32 %v351, %v352
        %v354 = vrot.slane %v353, 1
        %v355 = vadd.f32 %v353, %v354
        %v356 = vsel %vm235, %v346, 0.0
        %v357 = vrot.slane %v356, 4
        %v358 = vadd.f32 %v356, %v357
        %v359 = vrot.slane %v358, 2
        %v360 = vadd.f32 %v358, %v359
        %v361 = vrot.slane %v360, 1
        %v362 = vadd.f32 %v360, %v361
        %v363 = vmul.f32 %v314, %v228
        %365 = vst [vmem:[#allocation1] ss:$2 sm:$0xff] %v363
        %v366 = vld.sshfl [vmem:[#allocation1] sm:$0xff pattern:$0x75316420]
        %v367 = vld.sshfl [vmem:[#allocation1 + $0x8] sm:$0xff pattern:$0x75316420]
        %v370 = vsel %vm235, %v366, 0.0
        %v371 = vrot.slane %v370, 4
        %v372 = vadd.f32 %v370, %v371
        %v373 = vrot.slane %v372, 2
        %v374 = vadd.f32 %v372, %v373
        %v375 = vrot.slane %v374, 1
        %v376 = vadd.f32 %v374, %v375
        %v377 = vsel %vm235, %v367, 0.0
        %v378 = vrot.slane %v377, 4
        %v379 = vadd.f32 %v377, %v378
        %v380 = vrot.slane %v379, 2
        %v381 = vadd.f32 %v379, %v380
        %v382 = vrot.slane %v381, 1
        %v383 = vadd.f32 %v381, %v382
        %v384 = vsub.f32 0.0, %v376
        %v385 = vsub.f32 0.0, %v383
        %v386 = vsub.f32 %v299, %v279
        %v387 = vsub.f32 %v306, %v286
        %v388 = vmul.f32 %v386, %v355
        %v389 = vmul.f32 %v387, %v362
        %v390 = vsub.f32 %v384, %v388
        %v391 = vsub.f32 %v385, %v389
        %v392 = vrcp.pop %v355
        %v393 = vmul.f32 %v355, %v392
        %v394 = vsub.f32 1.0, %v393
        %v395 = vmul.f32 %v392, %v394
        %v396 = vadd.f32 %v392, %v395
        %vm397 = vweird.f32 %v355
        %vm398 = vweird.f32 %v392
        %vm399 = vmor %vm397, %vm398
        %v400 = vsel %vm399, %v392, %v396
        %v401 = vand.u32 2147483647, %v355
        %vm402 = vcmp.eq.f32.partialorder %v401, 8.507059e+37
        %v403 = vand.u32 %v355, 2147483648
        %v404 = vor.u32 1.1754944e-38, %v403
        %v405 = vsel %vm402, %v404, %v400
        %v406 = vmul.f32 1.0, %v405
        %v407 = vrcp.pop %v362
        %v408 = vmul.f32 %v362, %v407
        %v409 = vsub.f32 1.0, %v408
        %v410 = vmul.f32 %v407, %v409
        %v411 = vadd.f32 %v407, %v410
        %vm412 = vweird.f32 %v362
        %vm413 = vweird.f32 %v407
        %vm414 = vmor %vm412, %vm413
        %v415 = vsel %vm414, %v407, %v411
        %v416 = vand.u32 2147483647, %v362
        %vm417 = vcmp.eq.f32.partialorder %v416, 8.507059e+37
        %v418 = vand.u32 %v362, 2147483648
        %v419 = vor.u32 1.1754944e-38, %v418
        %v420 = vsel %vm417, %v419, %v415
        %v421 = vmul.f32 1.0, %v420
        %v422 = vmul.f32 %v335, %v406
        %v423 = vmul.f32 %v342, %v421
        %v424 = vlog2.pop %v422
        %v425 = vmul.f32 %v424, 0.6931472
        %v426 = vlog2.pop %v423
        %v427 = vmul.f32 %v426, 0.6931472
        %v428 = vmul.f32 %v390, %v406
        %v429 = vmul.f32 %v391, %v421
        %v430 = vadd.f32 %v425, %v428
        %v431 = vadd.f32 %v427, %v429
        %v432 = vsel %vm254, %v430, 0.0
        %v433 = vsel %vm254, %v431, 0.0
        %v434 = vadd.f32 %v432, %v433
        %435 = vadd.xlane.f32.xlu0 %v434
        %v436 = vpop.xlane.xlu0 %435
        %v437 = vrot.slane %v436, 4
        %v438 = vadd.f32 %v436, %v437
        %v439 = vrot.slane %v438, 2
        %v440 = vadd.f32 %v438, %v439
        %v441 = vrot.slane %v440, 1
        %v442 = vadd.f32 %v440, %v441
        %s443 = vtos %v442
        %v444 = vlaneseq
        %v445 = vshrl.u32 %v444, 7
        %vm446 = vcmp.eq.s32.totalorder %v445, 0
        %v447 = vstv %s266
        %v448 = vstv %s443
        %v449 = vsel %vm446, %v447, %v448
        %450 = vst [vmem:[%s223] sm:$0x3] %v449
        %s451 = sand.u32 %s100, 1
        %s452 = scalar_lea.sflag [#allocation4], %s451
        %s453 = sand.u32 %s100, 1
        %s454 = smul.addr %s453, 2
        %s455 = scalar_lea.vmem [#allocation7], %s454
        // Predicated region
        $region37: #{tpu_custom_call.1} parent=27 // pred_check
          %p456 = pneg %p110
        $region38: #{tpu_custom_call.1} parent=27 // pred_check_branch
          %458 = sbr.rel (%p456) target = $region40
        $region39: #{tpu_custom_call.1} parent=27 // pred_region
          %460 = vsyncadd %s452, 0
          %s461 = sadd.s32 %s27, %s26
          %s462 = smul.addr %s461, 2
          %s463 = scalar_lea.hbm %s2, %s462
          %s465 = sshll.u32 %s455, 4
          %s466 = int_to_ptr.vmem [resolvable:$true] %s465
          %s467 = sshll.u32 %s463, 4
          %s468 = int_to_ptr.hbm [resolvable:$true] %s467
          %470 = dma.vmem_to_hbm [thread:$0]  %s466, 32, %s468, %s452
        $region40: #{tpu_custom_call.1} parent=27 // pred_fallthru
          _
      $region28: #{tpu_custom_call.1} parent=5 // pred_fallthru
        _
      %p471 = scmp.le.s32.totalorder 2, %s17
      // Predicated region
      $region41: #{tpu_custom_call.1} parent=5 // pred_check
        %p472 = pneg %p471
      $region42: #{tpu_custom_call.1} parent=5 // pred_check_branch
        %474 = sbr.rel (%p472) target = $region44
      $region43: #{tpu_custom_call.1} parent=5 // pred_region
        %s475 = ssub.s32 %s17, 2
        // Predicated region
        $region45: #{tpu_custom_call.1} parent=43 // pred_check
          %p476 = pneg %p116
        $region46: #{tpu_custom_call.1} parent=43 // pred_check_branch
          %478 = sbr.rel (%p476) target = $region48
        $region47: #{tpu_custom_call.1} parent=43 // pred_region
          %s479 = sand.u32 %s101, 1
          %s480 = scalar_lea.sflag [#allocation4], %s479
          %s481 = sand.u32 %s101, 1
          %s482 = smul.addr %s481, 2
          %s483 = scalar_lea.vmem [#allocation7], %s482
          %485 = dma.done %s480, 32
        $region48: #{tpu_custom_call.1} parent=43 // pred_fallthru
          _
      $region44: #{tpu_custom_call.1} parent=5 // pred_fallthru
        _
    $region6: #{tpu_custom_call.1} parent=1 // loop_footer
      %s21 = sadd.s32 1, %s17
    $region7: #{tpu_custom_call.1} parent=1 // loop_footer_branch
      %16 = sbr.rel target = $region3
    $region8: #{tpu_custom_call.1} parent=1 // loop_exit
      _
    %486 = vsyncpa [#allocation3], 1
    %s487 = scalar_lea.sflag [#allocation3], 1
    %488 = vsyncpa %s487, 1
    %489 = vsyncpa [#allocation6], 1
    %s490 = scalar_lea.sflag [#allocation6], 1
    %491 = vsyncpa %s490, 1
    %492 = vsyncpa [#allocation4], 1
    %s493 = scalar_lea.sflag [#allocation4], 1
    %494 = vsyncpa %s493, 1

</llo_original>
